<compile_context>
chip_gen: v6e
topology: v6e:2x2x1
jax: 0.10.0
libtpu: 0.0.40
codegen_flags: <defaults>
</compile_context>

<pallas_src>
import jax
import jax.numpy as jnp
from jax.experimental import pallas as pl
from jax.experimental.pallas import tpu as pltpu

# ---------------- model hyper-params (consistent with the module) ----------
IN_DIM = 16      # args.in_dim (nmarker)
H_DIM = 32       # args.h_dim
N_CELL = 8       # ncell
BATCH = 2
N_OUT = 21       # dec2 output width
LANES = 128      # TPU lane width; feature dims are zero-padded to this
BN = BATCH * N_CELL
# args.nblock = 2 (two PermEqui2 blocks below), pool='mean', out_pool='max'

# weight-slab row layout (all offsets are sublane-aligned multiples of 8)
R_MM = 0                  # (BN, BN)          block-diag per-set mean matrix
R_W1 = R_MM + BN          # (IN_DIM, 2*LANES) [Gamma1 | -Lambda1]
R_W2 = R_W1 + IN_DIM      # (LANES,  2*LANES) [Gamma2 | -Lambda2]
R_D = R_W2 + LANES        # (LANES,  2*LANES) [dec1 | dec2]  (shared rows)
R_TOT = R_D + LANES       # 288 rows total


def _elu(v):
    # ELU with alpha=1.0 (matches nn.ELU default); overflow-safe.
    return jnp.where(v > 0, v, jnp.exp(jnp.minimum(v, 0.0)) - 1.0)


def cytoset_kernel(x_ref, w_ref, b_ref, out_ref):
    """Single invocation: whole batch. x is (BN, IN_DIM); params in two slabs."""
    f32 = jnp.float32
    x = x_ref[...]                                    # (BN, IN_DIM)

    mmat = w_ref[R_MM:R_MM + BN, 0:BN]                # (BN, BN) per-set mean
    w1 = w_ref[R_W1:R_W1 + IN_DIM, :]                 # (IN_DIM, 2*LANES)
    w2 = w_ref[R_W2:R_W2 + LANES, :]                  # (LANES,  2*LANES)
    d1 = w_ref[R_D:R_D + LANES, 0:LANES]              # (LANES, LANES)  dec1
    d2 = w_ref[R_D:R_D + LANES, LANES:2 * LANES]      # (LANES, LANES)  dec2
    b1 = b_ref[0:1, :]                                # (1, LANES)
    b2 = b_ref[1:2, :]
    d1b = b_ref[2:3, :]
    d2b = b_ref[3:4, :]

    # ---- PermEqui2 block 1 + ELU: h = ELU(x@G1 + b1 - mean_set(x)@L1) ----
    # lanes [0:128) of r = Gamma path, lanes [128:256) = (-Lambda) path;
    # mmat @ (x @ -L1) == mean_set(x) @ -L1  (block-diagonal mean matrix).
    r = jnp.dot(x, w1, preferred_element_type=f32)    # (BN, 2*LANES)
    h = _elu(r[:, :LANES]
             + jnp.dot(mmat, r[:, LANES:], preferred_element_type=f32) + b1)

    # ---- PermEqui2 block 2 + ELU ----
    r = jnp.dot(h, w2, preferred_element_type=f32)    # (BN, 2*LANES)
    h = _elu(r[:, :LANES]
             + jnp.dot(mmat, r[:, LANES:], preferred_element_type=f32) + b2)

    # ---- out_pool: max over the N_CELL cells of each set (keepdim=False) ----
    # N_CELL == 8 matches the sublane count, so the reshape is tile-aligned.
    # TODO(synk): assumes exactly N_CELL valid cells per set; ragged/padded
    # sets would need a validity mask for both the mean and the max.
    z = jnp.max(h.reshape(BATCH, N_CELL, LANES), axis=1)   # (BATCH, LANES)

    # ---- dec1: Dropout -> Linear -> ELU -> Dropout ----
    # TODO(synk): Dropout(p=0.5) treated as identity (eval/inference semantics).
    z = _elu(jnp.dot(z, d1, preferred_element_type=f32) + d1b)   # ckpt rows

    # ---- dec2: Linear(h_dim, 21) ----
    logits = jnp.dot(z, d2, preferred_element_type=f32) + d2b

    # one full (8,128) unmasked store: rows [0:B)=logits, [B:2B)=ckpt, rest=0
    pad = jnp.zeros((8 - 2 * BATCH, LANES), f32)
    out_ref[...] = jnp.concatenate([logits, z, pad], axis=0)


def _build_slabs(params):
    """Pack the 10 parameters into one weight slab + one bias slab (f32).

    Called ONCE per parameter set (hoisted out of the forward path).
    Invariant: every padding row/column is exactly zero — the in-kernel K=128
    contractions and ELU(0)=0 rely on this.
    """
    g1w, g1b, l1w, g2w, g2b, l2w, d1w, d1b, d2w, d2b = params
    # block-diagonal per-set mean operator: (Mmat @ x)[r] = mean of r's set
    mmat = jnp.kron(jnp.eye(BATCH, dtype=jnp.float32),
                    jnp.full((N_CELL, N_CELL), 1.0 / N_CELL, jnp.float32))
    w = jnp.zeros((R_TOT, 2 * LANES), jnp.float32)
    w = w.at[R_MM:R_MM + BN, 0:BN].set(mmat)
    w = w.at[R_W1:R_W1 + IN_DIM, 0:H_DIM].set(g1w)
    w = w.at[R_W1:R_W1 + IN_DIM, LANES:LANES + H_DIM].set(-l1w)
    w = w.at[R_W2:R_W2 + H_DIM, 0:H_DIM].set(g2w)
    w = w.at[R_W2:R_W2 + H_DIM, LANES:LANES + H_DIM].set(-l2w)
    w = w.at[R_D:R_D + H_DIM, 0:H_DIM].set(d1w)                 # dec1, lanes [0:128)
    w = w.at[R_D:R_D + H_DIM, LANES:LANES + N_OUT].set(d2w)     # dec2, lanes [128:256)

    b = jnp.zeros((8, LANES), jnp.float32)
    b = b.at[0, 0:H_DIM].set(g1b[0])
    b = b.at[1, 0:H_DIM].set(g2b[0])
    b = b.at[2, 0:H_DIM].set(d1b[0])
    b = b.at[3, 0:N_OUT].set(d2b[0])
    return w, b


@jax.jit
def cytoset_forward(x, wslab, bslab):
    """Full CytoSetModel.forward. Returns the same 6-tuple as the PyTorch module.

    Takes the pre-packed slabs so parameter packing is off the hot path.
    """
    B, N, D = x.shape
    assert (B, N, D) == (BATCH, N_CELL, IN_DIM)
    x2 = x.reshape(B * N, D)                          # (BN, IN_DIM)

    vmem = pl.BlockSpec(memory_space=pltpu.MemorySpace.VMEM)
    out = pl.pallas_call(
        cytoset_kernel,
        in_specs=[vmem, vmem, vmem],                  # whole arrays, no grid,
        out_specs=vmem,                               # no pipeline overhead
        out_shape=jax.ShapeDtypeStruct((8, LANES), jnp.float32),
    )(x2, wslab, bslab)

    logits = out[:BATCH, :N_OUT]                      # (B, 21)
    ckpt_x = out[BATCH:2 * BATCH, :H_DIM]             # (B, h_dim)

    prob = jax.nn.sigmoid(logits[:, 0])
    y_hat = jax.nn.relu(logits[:, 1])
    alpha_tune = jax.nn.softmax(logits[:, 2:11], axis=1)
    same_thr_tune = jax.nn.softmax(logits[:, 11:16], axis=1)
    diff_thr_tune = jax.nn.softmax(logits[:, 16:21], axis=1)
    return prob, y_hat, ckpt_x, alpha_tune, same_thr_tune, diff_thr_tune


def reference_forward(x, params):
    """Pure-JAX reference of the same computation (correctness check)."""
    g1w, g1b, l1w, g2w, g2b, l2w, d1w, d1b, d2w, d2b = params
    h = x
    xm = jnp.mean(h, axis=1, keepdims=True) @ l1w
    h = _elu(h @ g1w + g1b - xm)
    xm = jnp.mean(h, axis=1, keepdims=True) @ l2w
    h = _elu(h @ g2w + g2b - xm)
    z = jnp.max(h, axis=1)                            # out_pool = max
    z = _elu(z @ d1w + d1b)                           # dec1 (dropout = identity)
    logits = z @ d2w + d2b                            # dec2
    prob = jax.nn.sigmoid(logits[:, 0])
    y_hat = jax.nn.relu(logits[:, 1])
    return (prob, y_hat, z,
            jax.nn.softmax(logits[:, 2:11], axis=1),
            jax.nn.softmax(logits[:, 11:16], axis=1),
            jax.nn.softmax(logits[:, 16:21], axis=1))


def make_params():
    key = jax.random.PRNGKey(0)
    ks = jax.random.split(key, 11)
    s = 0.1
    g1w = jax.random.normal(ks[0], (IN_DIM, H_DIM), jnp.float32) * s
    g1b = jax.random.normal(ks[1], (1, H_DIM), jnp.float32) * s
    l1w = jax.random.normal(ks[2], (IN_DIM, H_DIM), jnp.float32) * s
    g2w = jax.random.normal(ks[3], (H_DIM, H_DIM), jnp.float32) * s
    g2b = jax.random.normal(ks[4], (1, H_DIM), jnp.float32) * s
    l2w = jax.random.normal(ks[5], (H_DIM, H_DIM), jnp.float32) * s
    d1w = jax.random.normal(ks[6], (H_DIM, H_DIM), jnp.float32) * s
    d1b = jax.random.normal(ks[7], (1, H_DIM), jnp.float32) * s
    d2w = jax.random.normal(ks[8], (H_DIM, N_OUT), jnp.float32) * s
    d2b = jax.random.normal(ks[9], (1, N_OUT), jnp.float32) * s
    return (g1w, g1b, l1w, g2w, g2b, l2w, d1w, d1b, d2w, d2b), ks[10]


if __name__ == "__main__":
    params, xkey = make_params()
    x = jax.random.normal(xkey, (BATCH, N_CELL, IN_DIM), jnp.float32)

    # Pack parameters ONCE; reuse the slabs for every forward call.
    wslab, bslab = _build_slabs(params)
    wslab, bslab = jax.block_until_ready((wslab, bslab))

    outs = cytoset_forward(x, wslab, bslab)
    outs = jax.block_until_ready(outs)

    refs = reference_forward(x, params)
    for o, r in zip(outs, refs):
        assert o.shape == r.shape, (o.shape, r.shape)
        assert jnp.allclose(o, r, atol=1e-5, rtol=1e-5), float(jnp.max(jnp.abs(o - r)))

    print("KERNEL_OK")
</pallas_src>

<mosaic_0001>
module attributes {stable_mosaic.version = 11 : i64} {
  func.func @cytoset_kernel(%arg0: memref<16x16xf32, #tpu.memory_space<vmem>>, %arg1: memref<288x256xf32, #tpu.memory_space<vmem>>, %arg2: memref<8x128xf32, #tpu.memory_space<vmem>>, %arg3: memref<8x128xf32, #tpu.memory_space<vmem>>) attributes {dimension_semantics = [], scalar_prefetch = 0 : i64, scratch_operands = 0 : i64, tpu.core_type = #tpu.core_type<tc>} {
    %c0 = arith.constant 0 : index
    %c0_0 = arith.constant 0 : index
    %0 = vector.load %arg0[%c0, %c0_0] : memref<16x16xf32, #tpu.memory_space<vmem>>, vector<16x16xf32>
    %c0_1 = arith.constant 0 : index
    %c0_2 = arith.constant 0 : index
    %1 = vector.load %arg1[%c0_1, %c0_2] : memref<288x256xf32, #tpu.memory_space<vmem>>, vector<16x16xf32>
    %c16 = arith.constant 16 : index
    %c0_3 = arith.constant 0 : index
    %2 = vector.load %arg1[%c16, %c0_3] : memref<288x256xf32, #tpu.memory_space<vmem>>, vector<16x256xf32>
    %c32 = arith.constant 32 : index
    %c0_4 = arith.constant 0 : index
    %3 = vector.load %arg1[%c32, %c0_4] : memref<288x256xf32, #tpu.memory_space<vmem>>, vector<128x256xf32>
    %c160 = arith.constant 160 : index
    %c0_5 = arith.constant 0 : index
    %4 = vector.load %arg1[%c160, %c0_5] : memref<288x256xf32, #tpu.memory_space<vmem>>, vector<128x128xf32>
    %c160_6 = arith.constant 160 : index
    %c128 = arith.constant 128 : index
    %5 = vector.load %arg1[%c160_6, %c128] : memref<288x256xf32, #tpu.memory_space<vmem>>, vector<128x128xf32>
    %c0_7 = arith.constant 0 : index
    %c0_8 = arith.constant 0 : index
    %6 = vector.load %arg2[%c0_7, %c0_8] : memref<8x128xf32, #tpu.memory_space<vmem>>, vector<1x128xf32>
    %c1 = arith.constant 1 : index
    %c0_9 = arith.constant 0 : index
    %7 = vector.load %arg2[%c1, %c0_9] : memref<8x128xf32, #tpu.memory_space<vmem>>, vector<1x128xf32>
    %c2 = arith.constant 2 : index
    %c0_10 = arith.constant 0 : index
    %8 = vector.load %arg2[%c2, %c0_10] : memref<8x128xf32, #tpu.memory_space<vmem>>, vector<1x128xf32>
    %c3 = arith.constant 3 : index
    %c0_11 = arith.constant 0 : index
    %9 = vector.load %arg2[%c3, %c0_11] : memref<8x128xf32, #tpu.memory_space<vmem>>, vector<1x128xf32>
    %cst = arith.constant dense<0.000000e+00> : vector<16x256xf32>
    %10 = tpu.matmul %0, %2, %cst {dimension_numbers = #tpu.dot_dimension_numbers<[1], [0], [0], [1], [0, 0, 1, 1], [], []>} : vector<16x16xf32>, vector<16x256xf32>, vector<16x256xf32> -> vector<16x256xf32>
    %11 = vector.extract_strided_slice %10 {offsets = [0, 0], sizes = [16, 128], strides = [1, 1]} : vector<16x256xf32> to vector<16x128xf32>
    %12 = vector.extract_strided_slice %10 {offsets = [0, 128], sizes = [16, 128], strides = [1, 1]} : vector<16x256xf32> to vector<16x128xf32>
    %cst_12 = arith.constant dense<0.000000e+00> : vector<16x128xf32>
    %13 = tpu.matmul %1, %12, %cst_12 {dimension_numbers = #tpu.dot_dimension_numbers<[1], [0], [0], [1], [0, 0, 1, 1], [], []>} : vector<16x16xf32>, vector<16x128xf32>, vector<16x128xf32> -> vector<16x128xf32>
    %14 = arith.addf %11, %13 : vector<16x128xf32>
    %15 = vector.broadcast %6 : vector<1x128xf32> to vector<16x128xf32>
    %16 = arith.addf %14, %15 : vector<16x128xf32>
    %cst_13 = arith.constant 0.000000e+00 : f32
    %17 = vector.broadcast %cst_13 : f32 to vector<16x128xf32>
    %18 = arith.cmpf ogt, %16, %17 : vector<16x128xf32>
    %cst_14 = arith.constant 0.000000e+00 : f32
    %19 = vector.broadcast %cst_14 : f32 to vector<16x128xf32>
    %20 = arith.minimumf %16, %19 : vector<16x128xf32>
    %21 = math.exp %20 : vector<16x128xf32>
    %cst_15 = arith.constant 1.000000e+00 : f32
    %22 = vector.broadcast %cst_15 : f32 to vector<16x128xf32>
    %23 = arith.subf %21, %22 : vector<16x128xf32>
    %24 = arith.select %18, %16, %23 : vector<16x128xi1>, vector<16x128xf32>
    %cst_16 = arith.constant dense<0.000000e+00> : vector<16x256xf32>
    %25 = tpu.matmul %24, %3, %cst_16 {dimension_numbers = #tpu.dot_dimension_numbers<[1], [0], [0], [1], [0, 0, 1, 1], [], []>} : vector<16x128xf32>, vector<128x256xf32>, vector<16x256xf32> -> vector<16x256xf32>
    %26 = vector.extract_strided_slice %25 {offsets = [0, 0], sizes = [16, 128], strides = [1, 1]} : vector<16x256xf32> to vector<16x128xf32>
    %27 = vector.extract_strided_slice %25 {offsets = [0, 128], sizes = [16, 128], strides = [1, 1]} : vector<16x256xf32> to vector<16x128xf32>
    %cst_17 = arith.constant dense<0.000000e+00> : vector<16x128xf32>
    %28 = tpu.matmul %1, %27, %cst_17 {dimension_numbers = #tpu.dot_dimension_numbers<[1], [0], [0], [1], [0, 0, 1, 1], [], []>} : vector<16x16xf32>, vector<16x128xf32>, vector<16x128xf32> -> vector<16x128xf32>
    %29 = arith.addf %26, %28 : vector<16x128xf32>
    %30 = vector.broadcast %7 : vector<1x128xf32> to vector<16x128xf32>
    %31 = arith.addf %29, %30 : vector<16x128xf32>
    %cst_18 = arith.constant 0.000000e+00 : f32
    %32 = vector.broadcast %cst_18 : f32 to vector<16x128xf32>
    %33 = arith.cmpf ogt, %31, %32 : vector<16x128xf32>
    %cst_19 = arith.constant 0.000000e+00 : f32
    %34 = vector.broadcast %cst_19 : f32 to vector<16x128xf32>
    %35 = arith.minimumf %31, %34 : vector<16x128xf32>
    %36 = math.exp %35 : vector<16x128xf32>
    %cst_20 = arith.constant 1.000000e+00 : f32
    %37 = vector.broadcast %cst_20 : f32 to vector<16x128xf32>
    %38 = arith.subf %36, %37 : vector<16x128xf32>
    %39 = arith.select %33, %31, %38 : vector<16x128xi1>, vector<16x128xf32>
    %40 = vector.shape_cast %39 : vector<16x128xf32> to vector<2x8x128xf32>
    %cst_21 = arith.constant dense<0xFF800000> : vector<2x128xf32>
    %41 = vector.multi_reduction <maximumf>, %40, %cst_21 [1] : vector<2x8x128xf32> to vector<2x128xf32>
    %cst_22 = arith.constant dense<0.000000e+00> : vector<2x128xf32>
    %42 = tpu.matmul %41, %4, %cst_22 {dimension_numbers = #tpu.dot_dimension_numbers<[1], [0], [0], [1], [0, 0, 1, 1], [], []>} : vector<2x128xf32>, vector<128x128xf32>, vector<2x128xf32> -> vector<2x128xf32>
    %43 = vector.broadcast %8 : vector<1x128xf32> to vector<2x128xf32>
    %44 = arith.addf %42, %43 : vector<2x128xf32>
    %cst_23 = arith.constant 0.000000e+00 : f32
    %45 = vector.broadcast %cst_23 : f32 to vector<2x128xf32>
    %46 = arith.cmpf ogt, %44, %45 : vector<2x128xf32>
    %cst_24 = arith.constant 0.000000e+00 : f32
    %47 = vector.broadcast %cst_24 : f32 to vector<2x128xf32>
    %48 = arith.minimumf %44, %47 : vector<2x128xf32>
    %49 = math.exp %48 : vector<2x128xf32>
    %cst_25 = arith.constant 1.000000e+00 : f32
    %50 = vector.broadcast %cst_25 : f32 to vector<2x128xf32>
    %51 = arith.subf %49, %50 : vector<2x128xf32>
    %52 = arith.select %46, %44, %51 : vector<2x128xi1>, vector<2x128xf32>
    %cst_26 = arith.constant dense<0.000000e+00> : vector<2x128xf32>
    %53 = tpu.matmul %52, %5, %cst_26 {dimension_numbers = #tpu.dot_dimension_numbers<[1], [0], [0], [1], [0, 0, 1, 1], [], []>} : vector<2x128xf32>, vector<128x128xf32>, vector<2x128xf32> -> vector<2x128xf32>
    %54 = vector.broadcast %9 : vector<1x128xf32> to vector<2x128xf32>
    %55 = arith.addf %53, %54 : vector<2x128xf32>
    %cst_27 = arith.constant 0.000000e+00 : f32
    %56 = vector.broadcast %cst_27 : f32 to vector<4x128xf32>
    %57 = tpu.concatenate %55, %52, %56 in 0 : vector<2x128xf32>, vector<2x128xf32>, vector<4x128xf32> -> vector<8x128xf32>
    %c0_28 = arith.constant 0 : index
    %c0_29 = arith.constant 0 : index
    %58 = vector.load %arg3[%c0_28, %c0_29] : memref<8x128xf32, #tpu.memory_space<vmem>>, vector<8x128xf32>
    tpu.vector_store %arg3[%c0_28, %c0_29], %57 {strides = array<i32>} : memref<8x128xf32, #tpu.memory_space<vmem>>, vector<8x128xf32>,
    return
  }
}

</mosaic_0001>

<llo_original>
// kernel: cytoset_forward.1
$region0: #{cytoset_forward.1}
  #allocation0 [shape = 'u32[]', space=smem, size = 0x4, offset = 0x4, fixed_abs, tag = 'smem constant byte address 0x4 - core index']
  #allocation1 [shape = 'u32[144,128]{1,0:T(1,128)}', space=vmem, size = 0x12000, scoped, tag = 'internal scratch']
  %s0 = inlined_call_operand.hbm [shape: f32[16,16], index: 0, kind: input, shape index: {}]
  %s1 = inlined_call_operand.hbm [shape: f32[288,256], index: 1, kind: input, shape index: {}]
  %s2 = inlined_call_operand.hbm [shape: f32[8,128], index: 2, kind: input, shape index: {}]
  %s3 = inlined_call_operand.vmem [shape: f32[8,128], index: 3, kind: output, shape index: {}]
  %s4 = sld [smem:[#allocation0]]
  $region34: #{cytoset_forward.1} parent=0
    _
  %s6 = ssub.s32 1, %s4
  %s7 = scalar_select 0, %s6, %s4
  $region1: #{cytoset_forward.1} parent=0
    #allocation2 [shape = 'u8[8192]{0}', space=vmem, size = 0x2000, scoped, tag = 'input window, operand 0, single buffered']
    #allocation3 [shape = 's32[1]{0}', space=sflag, size = 0x4, scoped, tag = 'scoped memory for cytoset_forward.1']
    #allocation4 [shape = 'u8[294912]{0}', space=vmem, size = 0x48000, scoped, tag = 'input window, operand 1, single buffered']
    #allocation5 [shape = 's32[1]{0}', space=sflag, size = 0x4, scoped, tag = 'scoped memory for cytoset_forward.1']
    #allocation6 [shape = 'u8[4096]{0}', space=vmem, size = 0x1000, scoped, tag = 'input window, operand 2, single buffered']
    %8 = vsyncpa [#allocation3], 0
    %9 = vsyncpa [#allocation5], 0
    // Predicated region
    $region2: #{cytoset_forward.1} parent=1 // pred_check
      _
    $region3: #{cytoset_forward.1} parent=1 // pred_check_branch
      %11 = sbr.rel (0) target = $region5
    $region4: #{cytoset_forward.1} parent=1 // pred_region
      %s13 = ssub.s32 256, 256
      %14 = vsyncadd [#allocation3], %s13
      %s15 = sshll.u32 [#allocation2], 4
      %s16 = int_to_ptr.vmem [resolvable:$true] %s15
      %21 = dma.hbm_to_vmem [thread:$0]  %s0, 256, %s16, [#allocation3], 128, 128, 8
    $region5: #{cytoset_forward.1} parent=1 // pred_fallthru
      _
    // Predicated region
    $region6: #{cytoset_forward.1} parent=1 // pred_check
      _
    $region7: #{cytoset_forward.1} parent=1 // pred_check_branch
      %23 = sbr.rel (0) target = $region9
    $region8: #{cytoset_forward.1} parent=1 // pred_region
      %s25 = ssub.s32 9216, 9216
      %26 = vsyncadd [#allocation5], %s25
      %s27 = sshll.u32 [#allocation4], 4
      %s28 = int_to_ptr.vmem [resolvable:$true] %s27
      %33 = dma.hbm_to_vmem [thread:$0]  %s1, 9216, %s28, [#allocation5], 256, 256, 16
    $region9: #{cytoset_forward.1} parent=1 // pred_fallthru
      _
    // Predicated region
    $region10: #{cytoset_forward.1} parent=1 // pred_check
      _
    $region11: #{cytoset_forward.1} parent=1 // pred_check_branch
      %35 = sbr.rel (0) target = $region13
    $region12: #{cytoset_forward.1} parent=1 // pred_region
      %s37 = ssub.s32 128, 128
      %38 = vsyncadd [#allocation5], %s37
      %s40 = sshll.u32 [#allocation6], 4
      %s41 = int_to_ptr.vmem [resolvable:$true] %s40
      %43 = dma.hbm_to_vmem [thread:$0]  %s2, 128, %s41, [#allocation5]
    $region13: #{cytoset_forward.1} parent=1 // pred_fallthru
      _
    // Predicated region
    $region14: #{cytoset_forward.1} parent=1 // pred_check
      _
    $region15: #{cytoset_forward.1} parent=1 // pred_check_branch
      %45 = sbr.rel (0) target = $region17
    $region16: #{cytoset_forward.1} parent=1 // pred_region
      %46 = dma.done [#allocation3], 256
    $region17: #{cytoset_forward.1} parent=1 // pred_fallthru
      _
    // Predicated region
    $region18: #{cytoset_forward.1} parent=1 // pred_check
      _
    $region19: #{cytoset_forward.1} parent=1 // pred_check_branch
      %48 = sbr.rel (0) target = $region21
    $region20: #{cytoset_forward.1} parent=1 // pred_region
      %49 = dma.done [#allocation5], 9216
    $region21: #{cytoset_forward.1} parent=1 // pred_fallthru
      _
    // Predicated region
    $region22: #{cytoset_forward.1} parent=1 // pred_check
      _
    $region23: #{cytoset_forward.1} parent=1 // pred_check_branch
      %51 = sbr.rel (0) target = $region25
    $region24: #{cytoset_forward.1} parent=1 // pred_region
      %52 = dma.done [#allocation5], 128
    $region25: #{cytoset_forward.1} parent=1 // pred_fallthru
      _
    %v53 = vld [vmem:[#allocation2] sm:$0xff]
    %v54 = vld [vmem:[#allocation2 + $0x8] sm:$0xff]
    %v55 = vld [vmem:[#allocation4] sm:$0xff]
    %v56 = vld [vmem:[#allocation4 + $0x10] sm:$0xff]
    %v57 = vld [vmem:[#allocation4 + $0x20] sm:$0xff]
    %v58 = vld [vmem:[#allocation4 + $0x28] sm:$0xff]
    %v59 = vld [vmem:[#allocation4 + $0x30] sm:$0xff]
    %v60 = vld [vmem:[#allocation4 + $0x38] sm:$0xff]
    %v61 = vld [vmem:[#allocation4 + $0x40] sm:$0xff]
    %v62 = vld [vmem:[#allocation4 + $0x48] sm:$0xff]
    %v63 = vld [vmem:[#allocation4 + $0x50] sm:$0xff]
    %v64 = vld [vmem:[#allocation4 + $0x58] sm:$0xff]
    %v65 = vld [vmem:[#allocation4 + $0x60] sm:$0xff]
    %v66 = vld [vmem:[#allocation4 + $0x68] sm:$0xff]
    %v67 = vld [vmem:[#allocation4 + $0x70] sm:$0xff]
    %v68 = vld [vmem:[#allocation4 + $0x78] sm:$0xff]
    %v69 = vld [vmem:[#allocation4 + $0x80] sm:$0xff]
    %v70 = vld [vmem:[#allocation4 + $0x88] sm:$0xff]
    %v71 = vld [vmem:[#allocation4 + $0x90] sm:$0xff]
    %v72 = vld [vmem:[#allocation4 + $0x98] sm:$0xff]
    %v73 = vld [vmem:[#allocation4 + $0xa0] sm:$0xff]
    %v74 = vld [vmem:[#allocation4 + $0xa8] sm:$0xff]
    %v75 = vld [vmem:[#allocation4 + $0xb0] sm:$0xff]
    %v76 = vld [vmem:[#allocation4 + $0xb8] sm:$0xff]
    %v77 = vld [vmem:[#allocation4 + $0xc0] sm:$0xff]
    %v78 = vld [vmem:[#allocation4 + $0xc8] sm:$0xff]
    %v79 = vld [vmem:[#allocation4 + $0xd0] sm:$0xff]
    %v80 = vld [vmem:[#allocation4 + $0xd8] sm:$0xff]
    %v81 = vld [vmem:[#allocation4 + $0xe0] sm:$0xff]
    %v82 = vld [vmem:[#allocation4 + $0xe8] sm:$0xff]
    %v83 = vld [vmem:[#allocation4 + $0xf0] sm:$0xff]
    %v84 = vld [vmem:[#allocation4 + $0xf8] sm:$0xff]
    %v85 = vld [vmem:[#allocation4 + $0x100] sm:$0xff]
    %v86 = vld [vmem:[#allocation4 + $0x108] sm:$0xff]
    %v87 = vld [vmem:[#allocation4 + $0x110] sm:$0xff]
    %v88 = vld [vmem:[#allocation4 + $0x118] sm:$0xff]
    %v89 = vld [vmem:[#allocation4 + $0x120] sm:$0xff]
    %v90 = vld [vmem:[#allocation4 + $0x128] sm:$0xff]
    %v91 = vld [vmem:[#allocation4 + $0x130] sm:$0xff]
    %v92 = vld [vmem:[#allocation4 + $0x138] sm:$0xff]
    %v93 = vld [vmem:[#allocation4 + $0x140] sm:$0xff]
    %v94 = vld [vmem:[#allocation4 + $0x150] sm:$0xff]
    %v95 = vld [vmem:[#allocation4 + $0x160] sm:$0xff]
    %v96 = vld [vmem:[#allocation4 + $0x170] sm:$0xff]
    %v97 = vld [vmem:[#allocation4 + $0x180] sm:$0xff]
    %v98 = vld [vmem:[#allocation4 + $0x190] sm:$0xff]
    %v99 = vld [vmem:[#allocation4 + $0x1a0] sm:$0xff]
    %v100 = vld [vmem:[#allocation4 + $0x1b0] sm:$0xff]
    %v101 = vld [vmem:[#allocation4 + $0x1c0] sm:$0xff]
    %v102 = vld [vmem:[#allocation4 + $0x1d0] sm:$0xff]
    %v103 = vld [vmem:[#allocation4 + $0x1e0] sm:$0xff]
    %v104 = vld [vmem:[#allocation4 + $0x1f0] sm:$0xff]
    %v105 = vld [vmem:[#allocation4 + $0x200] sm:$0xff]
    %v106 = vld [vmem:[#allocation4 + $0x210] sm:$0xff]
    %v107 = vld [vmem:[#allocation4 + $0x220] sm:$0xff]
    %v108 = vld [vmem:[#allocation4 + $0x230] sm:$0xff]
    %v109 = vld [vmem:[#allocation4 + $0x148] sm:$0xff]
    %v110 = vld [vmem:[#allocation4 + $0x158] sm:$0xff]
    %v111 = vld [vmem:[#allocation4 + $0x168] sm:$0xff]
    %v112 = vld [vmem:[#allocation4 + $0x178] sm:$0xff]
    %v113 = vld [vmem:[#allocation4 + $0x188] sm:$0xff]
    %v114 = vld [vmem:[#allocation4 + $0x198] sm:$0xff]
    %v115 = vld [vmem:[#allocation4 + $0x1a8] sm:$0xff]
    %v116 = vld [vmem:[#allocation4 + $0x1b8] sm:$0xff]
    %v117 = vld [vmem:[#allocation4 + $0x1c8] sm:$0xff]
    %v118 = vld [vmem:[#allocation4 + $0x1d8] sm:$0xff]
    %v119 = vld [vmem:[#allocation4 + $0x1e8] sm:$0xff]
    %v120 = vld [vmem:[#allocation4 + $0x1f8] sm:$0xff]
    %v121 = vld [vmem:[#allocation4 + $0x208] sm:$0xff]
    %v122 = vld [vmem:[#allocation4 + $0x218] sm:$0xff]
    %v123 = vld [vmem:[#allocation4 + $0x228] sm:$0xff]
    %v124 = vld [vmem:[#allocation4 + $0x238] sm:$0xff]
    %v125 = vld [vmem:[#allocation6] sm:$0x1]
    %v126 = vld [vmem:[#allocation6 + $0x1] sm:$0x1]
    %v127 = vld [vmem:[#allocation6 + $0x2] sm:$0x1]
    %v128 = vld [vmem:[#allocation6 + $0x3] sm:$0x1]
    %vm129 = vcmask 130048
    %v131 = vsel %vm129, %v53, 0
    %v134 = vsel %vm129, %v54, 0
    %136 = vmatprep.subr.mxu0 0.0
    %137 = vmatpush1.msra.mxu0 0.0
    %138 = vmatprep.subr.mxu0 0.0
    %139 = vmatpush1.msra.mxu0 0.0
    %140 = vmatprep.subr.mxu0 0.0
    %141 = vmatpush1.msra.mxu0 0.0
    %142 = vmatprep.subr.mxu0 0.0
    %143 = vmatpush1.msra.mxu0 0.0
    %144 = vmatprep.subr.mxu0 0.0
    %145 = vmatpush1.msra.mxu0 0.0
    %146 = vmatprep.subr.mxu0 0.0
    %147 = vmatpush1.msra.mxu0 0.0
    %148 = vmatprep.subr.mxu0 0.0
    %149 = vmatpush1.msra.mxu0 0.0
    %150 = vmatprep.subr.mxu0 0.0
    %151 = vmatpush1.msra.mxu0 0.0
    %152 = vmatprep.subr.mxu0 0.0
    %153 = vmatpush1.msra.mxu0 0.0
    %154 = vmatprep.subr.mxu0 0.0
    %155 = vmatpush1.msra.mxu0 0.0
    %156 = vmatprep.subr.mxu0 0.0
    %157 = vmatpush1.msra.mxu0 0.0
    %158 = vmatprep.subr.mxu0 0.0
    %159 = vmatpush1.msra.mxu0 0.0
    %160 = vmatprep.subr.mxu0 0.0
    %161 = vmatpush1.msra.mxu0 0.0
    %162 = vmatprep.subr.mxu0 0.0
    %163 = vmatpush1.msra.mxu0 0.0
    %164 = vmatprep.subr.mxu0 %v60
    %165 = vmatpush1.msra.mxu0 %v59
    %166 = vmatprep.subr.mxu0 %v58
    %167 = vmatpush1.msra.mxu0 %v57
    %168 = vmatprep.subr.mxu0 0.0
    %169 = vmatpush2.msra.mxu0 0.0
    %170 = vmatprep.subr.mxu0 0.0
    %171 = vmatpush2.msra.mxu0 0.0
    %172 = vmatprep.subr.mxu0 0.0
    %173 = vmatpush2.msra.mxu0 0.0
    %174 = vmatprep.subr.mxu0 0.0
    %175 = vmatpush2.msra.mxu0 0.0
    %176 = vmatprep.subr.mxu0 0.0
    %177 = vmatpush2.msra.mxu0 0.0
    %178 = vmatprep.subr.mxu0 0.0
    %179 = vmatpush2.msra.mxu0 0.0
    %180 = vmatprep.subr.mxu0 0.0
    %181 = vmatpush2.msra.mxu0 0.0
    %182 = vmatprep.subr.mxu0 0.0
    %183 = vmatpush2.msra.mxu0 0.0
    %184 = vmatprep.subr.mxu0 0.0
    %185 = vmatpush2.msra.mxu0 0.0
    %186 = vmatprep.subr.mxu0 0.0
    %187 = vmatpush2.msra.mxu0 0.0
    %188 = vmatprep.subr.mxu0 0.0
    %189 = vmatpush2.msra.mxu0 0.0
    %190 = vmatprep.subr.mxu0 0.0
    %191 = vmatpush2.msra.mxu0 0.0
    %192 = vmatprep.subr.mxu0 0.0
    %193 = vmatpush2.msra.mxu0 0.0
    %194 = vmatprep.subr.mxu0 0.0
    %195 = vmatpush2.msra.mxu0 0.0
    %196 = vmatprep.subr.mxu0 0.0
    %197 = vmatpush2.msra.mxu0 0.0
    %198 = vmatprep.subr.mxu0 0.0
    %199 = vmatpush2.msra.mxu0 0.0
    %200 = vmatprep.mubr.f32.mxu0 0.0
    %201 = vmatmul.mubr.f32.gmra.mxu0 %v131
    %v202 = vpop.f32.mrf.mxu0
    %v203 = vadd.f32 0.0, %v202
    %v204 = vpop.f32.mrf.mxu0
    %v205 = vadd.f32 0.0, %v204
    %206 = vmatprep.mubr.f32.mxu0 0.0
    %207 = vmatmul.mubr.f32.gmra.mxu0 %v134
    %v208 = vpop.f32.mrf.mxu0
    %v209 = vadd.f32 0.0, %v208
    %v210 = vpop.f32.mrf.mxu0
    %v211 = vadd.f32 0.0, %v210
    %212 = vdwg.mxu0
    %v214 = vsel %vm129, %v55, 0
    %v217 = vsel %vm129, %v56, 0
    %219 = vmatprep.subr.mxu0 0.0
    %220 = vmatpush1.msra.mxu0 0.0
    %221 = vmatprep.subr.mxu0 0.0
    %222 = vmatpush1.msra.mxu0 0.0
    %223 = vmatprep.subr.mxu0 0.0
    %224 = vmatpush1.msra.mxu0 0.0
    %225 = vmatprep.subr.mxu0 0.0
    %226 = vmatpush1.msra.mxu0 0.0
    %227 = vmatprep.subr.mxu0 0.0
    %228 = vmatpush1.msra.mxu0 0.0
    %229 = vmatprep.subr.mxu0 0.0
    %230 = vmatpush1.msra.mxu0 0.0
    %231 = vmatprep.subr.mxu0 0.0
    %232 = vmatpush1.msra.mxu0 0.0
    %233 = vmatprep.subr.mxu0 0.0
    %234 = vmatpush1.msra.mxu0 0.0
    %235 = vmatprep.subr.mxu0 0.0
    %236 = vmatpush1.msra.mxu0 0.0
    %237 = vmatprep.subr.mxu0 0.0
    %238 = vmatpush1.msra.mxu0 0.0
    %239 = vmatprep.subr.mxu0 0.0
    %240 = vmatpush1.msra.mxu0 0.0
    %241 = vmatprep.subr.mxu0 0.0
    %242 = vmatpush1.msra.mxu0 0.0
    %243 = vmatprep.subr.mxu0 0.0
    %244 = vmatpush1.msra.mxu0 0.0
    %245 = vmatprep.subr.mxu0 0.0
    %246 = vmatpush1.msra.mxu0 0.0
    %247 = vmatprep.subr.mxu0 0.0
    %248 = vmatpush1.msra.mxu0 %v211
    %249 = vmatprep.subr.mxu0 0.0
    %250 = vmatpush1.msra.mxu0 %v205
    %251 = vmatprep.subr.mxu0 0.0
    %252 = vmatpush2.msra.mxu0 0.0
    %253 = vmatprep.subr.mxu0 0.0
    %254 = vmatpush2.msra.mxu0 0.0
    %255 = vmatprep.subr.mxu0 0.0
    %256 = vmatpush2.msra.mxu0 0.0
    %257 = vmatprep.subr.mxu0 0.0
    %258 = vmatpush2.msra.mxu0 0.0
    %259 = vmatprep.subr.mxu0 0.0
    %260 = vmatpush2.msra.mxu0 0.0
    %261 = vmatprep.subr.mxu0 0.0
    %262 = vmatpush2.msra.mxu0 0.0
    %263 = vmatprep.subr.mxu0 0.0
    %264 = vmatpush2.msra.mxu0 0.0
    %265 = vmatprep.subr.mxu0 0.0
    %266 = vmatpush2.msra.mxu0 0.0
    %267 = vmatprep.subr.mxu0 0.0
    %268 = vmatpush2.msra.mxu0 0.0
    %269 = vmatprep.subr.mxu0 0.0
    %270 = vmatpush2.msra.mxu0 0.0
    %271 = vmatprep.subr.mxu0 0.0
    %272 = vmatpush2.msra.mxu0 0.0
    %273 = vmatprep.subr.mxu0 0.0
    %274 = vmatpush2.msra.mxu0 0.0
    %275 = vmatprep.subr.mxu0 0.0
    %276 = vmatpush2.msra.mxu0 0.0
    %277 = vmatprep.subr.mxu0 0.0
    %278 = vmatpush2.msra.mxu0 0.0
    %279 = vmatprep.subr.mxu0 0.0
    %280 = vmatpush2.msra.mxu0 0.0
    %281 = vmatprep.subr.mxu0 0.0
    %282 = vmatpush2.msra.mxu0 0.0
    %283 = vmatprep.mubr.f32.mxu0 0.0
    %284 = vmatmul.mubr.f32.gmra.mxu0 %v214
    %v285 = vpop.f32.mrf.mxu0
    %v286 = vadd.f32 0.0, %v285
    %v287 = vpop.f32.mrf.mxu0
    %288 = vmatprep.mubr.f32.mxu0 0.0
    %289 = vmatmul.mubr.f32.gmra.mxu0 %v217
    %v290 = vpop.f32.mrf.mxu0
    %v291 = vadd.f32 0.0, %v290
    %v292 = vpop.f32.mrf.mxu0
    %293 = vdwg.mxu0
    %v294 = vadd.f32 %v203, %v286
    %v295 = vadd.f32 %v209, %v291
    %v296 = vlaneseq
    %v297 = vshrl.u32 %v296, 7
    %v298 = vsub.s32 0, %v297
    %v299 = vrot.slane %v125, %v298
    %v300 = vadd.f32 %v294, %v299
    %v301 = vadd.f32 %v295, %v299
    %vm302 = vcmp.gt.f32.partialorder %v300, 0.0
    %vm303 = vcmp.gt.f32.partialorder %v301, 0.0
    %v304 = vmin.f32 %v300, 0.0
    %v305 = vmin.f32 %v301, 0.0
    %v306 = vmul.f32 %v304, 1.442695
    %v307 = vpow.pop %v306
    %v308 = vmul.f32 %v305, 1.442695
    %v309 = vpow.pop %v308
    %v310 = vsub.f32 %v307, 1.0
    %v311 = vsub.f32 %v309, 1.0
    %v312 = vsel %vm302, %v300, %v310
    %v313 = vsel %vm303, %v301, %v311
    %314 = vmatprep.subr.mxu0 %v92
    %315 = vmatpush1.msra.mxu0 %v91
    %316 = vmatprep.subr.mxu0 %v90
    %317 = vmatpush1.msra.mxu0 %v89
    %318 = vmatprep.subr.mxu0 %v88
    %319 = vmatpush1.msra.mxu0 %v87
    %320 = vmatprep.subr.mxu0 %v86
    %321 = vmatpush1.msra.mxu0 %v85
    %322 = vmatprep.subr.mxu0 %v84
    %323 = vmatpush1.msra.mxu0 %v83
    %324 = vmatprep.subr.mxu0 %v82
    %325 = vmatpush1.msra.mxu0 %v81
    %326 = vmatprep.subr.mxu0 %v80
    %327 = vmatpush1.msra.mxu0 %v79
    %328 = vmatprep.subr.mxu0 %v78
    %329 = vmatpush1.msra.mxu0 %v77
    %330 = vmatprep.subr.mxu0 %v76
    %331 = vmatpush1.msra.mxu0 %v75
    %332 = vmatprep.subr.mxu0 %v74
    %333 = vmatpush1.msra.mxu0 %v73
    %334 = vmatprep.subr.mxu0 %v72
    %335 = vmatpush1.msra.mxu0 %v71
    %336 = vmatprep.subr.mxu0 %v70
    %337 = vmatpush1.msra.mxu0 %v69
    %338 = vmatprep.subr.mxu0 %v68
    %339 = vmatpush1.msra.mxu0 %v67
    %340 = vmatprep.subr.mxu0 %v66
    %341 = vmatpush1.msra.mxu0 %v65
    %342 = vmatprep.subr.mxu0 %v64
    %343 = vmatpush1.msra.mxu0 %v63
    %344 = vmatprep.subr.mxu0 %v62
    %345 = vmatpush1.msra.mxu0 %v61
    %346 = vmatprep.subr.mxu0 0.0
    %347 = vmatpush2.msra.mxu0 0.0
    %348 = vmatprep.subr.mxu0 0.0
    %349 = vmatpush2.msra.mxu0 0.0
    %350 = vmatprep.subr.mxu0 0.0
    %351 = vmatpush2.msra.mxu0 0.0
    %352 = vmatprep.subr.mxu0 0.0
    %353 = vmatpush2.msra.mxu0 0.0
    %354 = vmatprep.subr.mxu0 0.0
    %355 = vmatpush2.msra.mxu0 0.0
    %356 = vmatprep.subr.mxu0 0.0
    %357 = vmatpush2.msra.mxu0 0.0
    %358 = vmatprep.subr.mxu0 0.0
    %359 = vmatpush2.msra.mxu0 0.0
    %360 = vmatprep.subr.mxu0 0.0
    %361 = vmatpush2.msra.mxu0 0.0
    %362 = vmatprep.subr.mxu0 0.0
    %363 = vmatpush2.msra.mxu0 0.0
    %364 = vmatprep.subr.mxu0 0.0
    %365 = vmatpush2.msra.mxu0 0.0
    %366 = vmatprep.subr.mxu0 0.0
    %367 = vmatpush2.msra.mxu0 0.0
    %368 = vmatprep.subr.mxu0 0.0
    %369 = vmatpush2.msra.mxu0 0.0
    %370 = vmatprep.subr.mxu0 0.0
    %371 = vmatpush2.msra.mxu0 0.0
    %372 = vmatprep.subr.mxu0 0.0
    %373 = vmatpush2.msra.mxu0 0.0
    %374 = vmatprep.subr.mxu0 0.0
    %375 = vmatpush2.msra.mxu0 0.0
    %376 = vmatprep.subr.mxu0 0.0
    %377 = vmatpush2.msra.mxu0 0.0
    %378 = vmatprep.mubr.f32.mxu0 0.0
    %379 = vmatmul.mubr.f32.gmra.mxu0 %v312
    %v380 = vpop.f32.mrf.mxu0
    %v381 = vadd.f32 0.0, %v380
    %v382 = vpop.f32.mrf.mxu0
    %v383 = vadd.f32 0.0, %v382
    %384 = vmatprep.mubr.f32.mxu0 0.0
    %385 = vmatmul.mubr.f32.gmra.mxu0 %v313
    %v386 = vpop.f32.mrf.mxu0
    %v387 = vadd.f32 0.0, %v386
    %v388 = vpop.f32.mrf.mxu0
    %v389 = vadd.f32 0.0, %v388
    %390 = vdwg.mxu0
    %391 = vmatprep.subr.mxu0 0.0
    %392 = vmatpush1.msra.mxu0 0.0
    %393 = vmatprep.subr.mxu0 0.0
    %394 = vmatpush1.msra.mxu0 0.0
    %395 = vmatprep.subr.mxu0 0.0
    %396 = vmatpush1.msra.mxu0 0.0
    %397 = vmatprep.subr.mxu0 0.0
    %398 = vmatpush1.msra.mxu0 0.0
    %399 = vmatprep.subr.mxu0 0.0
    %400 = vmatpush1.msra.mxu0 0.0
    %401 = vmatprep.subr.mxu0 0.0
    %402 = vmatpush1.msra.mxu0 0.0
    %403 = vmatprep.subr.mxu0 0.0
    %404 = vmatpush1.msra.mxu0 0.0
    %405 = vmatprep.subr.mxu0 0.0
    %406 = vmatpush1.msra.mxu0 0.0
    %407 = vmatprep.subr.mxu0 0.0
    %408 = vmatpush1.msra.mxu0 0.0
    %409 = vmatprep.subr.mxu0 0.0
    %410 = vmatpush1.msra.mxu0 0.0
    %411 = vmatprep.subr.mxu0 0.0
    %412 = vmatpush1.msra.mxu0 0.0
    %413 = vmatprep.subr.mxu0 0.0
    %414 = vmatpush1.msra.mxu0 0.0
    %415 = vmatprep.subr.mxu0 0.0
    %416 = vmatpush1.msra.mxu0 0.0
    %417 = vmatprep.subr.mxu0 0.0
    %418 = vmatpush1.msra.mxu0 0.0
    %419 = vmatprep.subr.mxu0 0.0
    %420 = vmatpush1.msra.mxu0 %v389
    %421 = vmatprep.subr.mxu0 0.0
    %422 = vmatpush1.msra.mxu0 %v383
    %423 = vmatprep.subr.mxu0 0.0
    %424 = vmatpush2.msra.mxu0 0.0
    %425 = vmatprep.subr.mxu0 0.0
    %426 = vmatpush2.msra.mxu0 0.0
    %427 = vmatprep.subr.mxu0 0.0
    %428 = vmatpush2.msra.mxu0 0.0
    %429 = vmatprep.subr.mxu0 0.0
    %430 = vmatpush2.msra.mxu0 0.0
    %431 = vmatprep.subr.mxu0 0.0
    %432 = vmatpush2.msra.mxu0 0.0
    %433 = vmatprep.subr.mxu0 0.0
    %434 = vmatpush2.msra.mxu0 0.0
    %435 = vmatprep.subr.mxu0 0.0
    %436 = vmatpush2.msra.mxu0 0.0
    %437 = vmatprep.subr.mxu0 0.0
    %438 = vmatpush2.msra.mxu0 0.0
    %439 = vmatprep.subr.mxu0 0.0
    %440 = vmatpush2.msra.mxu0 0.0
    %441 = vmatprep.subr.mxu0 0.0
    %442 = vmatpush2.msra.mxu0 0.0
    %443 = vmatprep.subr.mxu0 0.0
    %444 = vmatpush2.msra.mxu0 0.0
    %445 = vmatprep.subr.mxu0 0.0
    %446 = vmatpush2.msra.mxu0 0.0
    %447 = vmatprep.subr.mxu0 0.0
    %448 = vmatpush2.msra.mxu0 0.0
    %449 = vmatprep.subr.mxu0 0.0
    %450 = vmatpush2.msra.mxu0 0.0
    %451 = vmatprep.subr.mxu0 0.0
    %452 = vmatpush2.msra.mxu0 0.0
    %453 = vmatprep.subr.mxu0 0.0
    %454 = vmatpush2.msra.mxu0 0.0
    %455 = vmatprep.mubr.f32.mxu0 0.0
    %456 = vmatmul.mubr.f32.gmra.mxu0 %v214
    %v457 = vpop.f32.mrf.mxu0
    %v458 = vadd.f32 0.0, %v457
    %v459 = vpop.f32.mrf.mxu0
    %460 = vmatprep.mubr.f32.mxu0 0.0
    %461 = vmatmul.mubr.f32.gmra.mxu0 %v217
    %v462 = vpop.f32.mrf.mxu0
    %v463 = vadd.f32 0.0, %v462
    %v464 = vpop.f32.mrf.mxu0
    %465 = vdwg.mxu0
    %v466 = vadd.f32 %v381, %v458
    %v467 = vadd.f32 %v387, %v463
    %v468 = vlaneseq
    %v469 = vshrl.u32 %v468, 7
    %v470 = vsub.s32 0, %v469
    %v471 = vrot.slane %v126, %v470
    %v472 = vadd.f32 %v466, %v471
    %v473 = vadd.f32 %v467, %v471
    %vm474 = vcmp.gt.f32.partialorder %v472, 0.0
    %vm475 = vcmp.gt.f32.partialorder %v473, 0.0
    %v476 = vmin.f32 %v472, 0.0
    %v477 = vmin.f32 %v473, 0.0
    %v478 = vmul.f32 %v476, 1.442695
    %v479 = vpow.pop %v478
    %v480 = vmul.f32 %v477, 1.442695
    %v481 = vpow.pop %v480
    %v482 = vsub.f32 %v479, 1.0
    %v483 = vsub.f32 %v481, 1.0
    %v484 = vsel %vm474, %v472, %v482
    %v485 = vsel %vm475, %v473, %v483
    %v486 = vrot.slane %v484, 4
    %v487 = vmax.f32 %v484, %v486
    %v488 = vrot.slane %v487, 2
    %v489 = vmax.f32 %v487, %v488
    %v490 = vrot.slane %v489, 1
    %v491 = vmax.f32 %v489, %v490
    %v492 = vrot.slane %v485, 4
    %v493 = vmax.f32 %v485, %v492
    %v494 = vrot.slane %v493, 2
    %v495 = vmax.f32 %v493, %v494
    %v496 = vrot.slane %v495, 1
    %v497 = vmax.f32 %v495, %v496
    %v498 = vlaneseq
    %v499 = vshrl.u32 %v498, 7
    %v500 = vsub.s32 0, %v499
    %v501 = vrot.slane %v127, %v500
    %vm504 = vcmask 1041409
    %v505 = vsel %vm504, %v497, %v491
    %507 = vmatprep.subr.mxu0 0.0
    %508 = vmatpush1.msra.mxu0 %v108
    %509 = vmatprep.subr.mxu0 0.0
    %510 = vmatpush1.msra.mxu0 %v107
    %511 = vmatprep.subr.mxu0 0.0
    %512 = vmatpush1.msra.mxu0 %v106
    %513 = vmatprep.subr.mxu0 0.0
    %514 = vmatpush1.msra.mxu0 %v105
    %515 = vmatprep.subr.mxu0 0.0
    %516 = vmatpush1.msra.mxu0 %v104
    %517 = vmatprep.subr.mxu0 0.0
    %518 = vmatpush1.msra.mxu0 %v103
    %519 = vmatprep.subr.mxu0 0.0
    %520 = vmatpush1.msra.mxu0 %v102
    %521 = vmatprep.subr.mxu0 0.0
    %522 = vmatpush1.msra.mxu0 %v101
    %523 = vmatprep.subr.mxu0 0.0
    %524 = vmatpush1.msra.mxu0 %v100
    %525 = vmatprep.subr.mxu0 0.0
    %526 = vmatpush1.msra.mxu0 %v99
    %527 = vmatprep.subr.mxu0 0.0
    %528 = vmatpush1.msra.mxu0 %v98
    %529 = vmatprep.subr.mxu0 0.0
    %530 = vmatpush1.msra.mxu0 %v97
    %531 = vmatprep.subr.mxu0 0.0
    %532 = vmatpush1.msra.mxu0 %v96
    %533 = vmatprep.subr.mxu0 0.0
    %534 = vmatpush1.msra.mxu0 %v95
    %535 = vmatprep.subr.mxu0 0.0
    %536 = vmatpush1.msra.mxu0 %v94
    %537 = vmatprep.subr.mxu0 0.0
    %538 = vmatpush1.msra.mxu0 %v93
    %539 = vmatprep.subr.mxu0 0.0
    %540 = vmatpush2.msra.mxu0 0.0
    %541 = vmatprep.subr.mxu0 0.0
    %542 = vmatpush2.msra.mxu0 0.0
    %543 = vmatprep.subr.mxu0 0.0
    %544 = vmatpush2.msra.mxu0 0.0
    %545 = vmatprep.subr.mxu0 0.0
    %546 = vmatpush2.msra.mxu0 0.0
    %547 = vmatprep.subr.mxu0 0.0
    %548 = vmatpush2.msra.mxu0 0.0
    %549 = vmatprep.subr.mxu0 0.0
    %550 = vmatpush2.msra.mxu0 0.0
    %551 = vmatprep.subr.mxu0 0.0
    %552 = vmatpush2.msra.mxu0 0.0
    %553 = vmatprep.subr.mxu0 0.0
    %554 = vmatpush2.msra.mxu0 0.0
    %555 = vmatprep.subr.mxu0 0.0
    %556 = vmatpush2.msra.mxu0 0.0
    %557 = vmatprep.subr.mxu0 0.0
    %558 = vmatpush2.msra.mxu0 0.0
    %559 = vmatprep.subr.mxu0 0.0
    %560 = vmatpush2.msra.mxu0 0.0
    %561 = vmatprep.subr.mxu0 0.0
    %562 = vmatpush2.msra.mxu0 0.0
    %563 = vmatprep.subr.mxu0 0.0
    %564 = vmatpush2.msra.mxu0 0.0
    %565 = vmatprep.subr.mxu0 0.0
    %566 = vmatpush2.msra.mxu0 0.0
    %567 = vmatprep.subr.mxu0 0.0
    %568 = vmatpush2.msra.mxu0 0.0
    %569 = vmatprep.subr.mxu0 0.0
    %570 = vmatpush2.msra.mxu0 0.0
    %571 = vmatprep.mubr.f32.mxu0 0.0
    %572 = vmatmul.mubr.f32.gmra.mxu0 %v505
    %v573 = vpop.f32.mrf.mxu0
    %v574 = vadd.f32 %v501, %v573
    %v575 = vpop.f32.mrf.mxu0
    %576 = vdwg.mxu0
    %vm577 = vcmp.gt.f32.partialorder %v574, 0.0
    %v578 = vmin.f32 %v574, 0.0
    %v579 = vmul.f32 %v578, 1.442695
    %v580 = vpow.pop %v579
    %v581 = vsub.f32 %v580, 1.0
    %v582 = vsel %vm577, %v574, %v581
    %v583 = vlaneseq
    %v584 = vshrl.u32 %v583, 7
    %v585 = vsub.s32 0, %v584
    %v586 = vrot.slane %v128, %v585
    %587 = vmatprep.subr.mxu0 0.0
    %588 = vmatpush1.msra.mxu0 %v124
    %589 = vmatprep.subr.mxu0 0.0
    %590 = vmatpush1.msra.mxu0 %v123
    %591 = vmatprep.subr.mxu0 0.0
    %592 = vmatpush1.msra.mxu0 %v122
    %593 = vmatprep.subr.mxu0 0.0
    %594 = vmatpush1.msra.mxu0 %v121
    %595 = vmatprep.subr.mxu0 0.0
    %596 = vmatpush1.msra.mxu0 %v120
    %597 = vmatprep.subr.mxu0 0.0
    %598 = vmatpush1.msra.mxu0 %v119
    %599 = vmatprep.subr.mxu0 0.0
    %600 = vmatpush1.msra.mxu0 %v118
    %601 = vmatprep.subr.mxu0 0.0
    %602 = vmatpush1.msra.mxu0 %v117
    %603 = vmatprep.subr.mxu0 0.0
    %604 = vmatpush1.msra.mxu0 %v116
    %605 = vmatprep.subr.mxu0 0.0
    %606 = vmatpush1.msra.mxu0 %v115
    %607 = vmatprep.subr.mxu0 0.0
    %608 = vmatpush1.msra.mxu0 %v114
    %609 = vmatprep.subr.mxu0 0.0
    %610 = vmatpush1.msra.mxu0 %v113
    %611 = vmatprep.subr.mxu0 0.0
    %612 = vmatpush1.msra.mxu0 %v112
    %613 = vmatprep.subr.mxu0 0.0
    %614 = vmatpush1.msra.mxu0 %v111
    %615 = vmatprep.subr.mxu0 0.0
    %616 = vmatpush1.msra.mxu0 %v110
    %617 = vmatprep.subr.mxu0 0.0
    %618 = vmatpush1.msra.mxu0 %v109
    %619 = vmatprep.subr.mxu0 0.0
    %620 = vmatpush2.msra.mxu0 0.0
    %621 = vmatprep.subr.mxu0 0.0
    %622 = vmatpush2.msra.mxu0 0.0
    %623 = vmatprep.subr.mxu0 0.0
    %624 = vmatpush2.msra.mxu0 0.0
    %625 = vmatprep.subr.mxu0 0.0
    %626 = vmatpush2.msra.mxu0 0.0
    %627 = vmatprep.subr.mxu0 0.0
    %628 = vmatpush2.msra.mxu0 0.0
    %629 = vmatprep.subr.mxu0 0.0
    %630 = vmatpush2.msra.mxu0 0.0
    %631 = vmatprep.subr.mxu0 0.0
    %632 = vmatpush2.msra.mxu0 0.0
    %633 = vmatprep.subr.mxu0 0.0
    %634 = vmatpush2.msra.mxu0 0.0
    %635 = vmatprep.subr.mxu0 0.0
    %636 = vmatpush2.msra.mxu0 0.0
    %637 = vmatprep.subr.mxu0 0.0
    %638 = vmatpush2.msra.mxu0 0.0
    %639 = vmatprep.subr.mxu0 0.0
    %640 = vmatpush2.msra.mxu0 0.0
    %641 = vmatprep.subr.mxu0 0.0
    %642 = vmatpush2.msra.mxu0 0.0
    %643 = vmatprep.subr.mxu0 0.0
    %644 = vmatpush2.msra.mxu0 0.0
    %645 = vmatprep.subr.mxu0 0.0
    %646 = vmatpush2.msra.mxu0 0.0
    %647 = vmatprep.subr.mxu0 0.0
    %648 = vmatpush2.msra.mxu0 0.0
    %649 = vmatprep.subr.mxu0 0.0
    %650 = vmatpush2.msra.mxu0 0.0
    %651 = vmatprep.mubr.f32.mxu0 0.0
    %652 = vmatmul.mubr.f32.gmra.mxu0 %v582
    %v653 = vpop.f32.mrf.mxu0
    %v654 = vadd.f32 %v586, %v653
    %v655 = vpop.f32.mrf.mxu0
    %656 = vdwg.mxu0
    %v658 = vrot.slane %v582, 6
    %vm660 = vcmask 1041408
    %v661 = vsel %vm660, %v654, %v658
    %vm662 = vcmask 1043456
    %v663 = vsel %vm662, %v661, 0.0
    %664 = vst [vmem:[%s3] sm:$0xff] %v663
    // Predicated region
    $region26: #{cytoset_forward.1} parent=1 // pred_check
      _
    $region27: #{cytoset_forward.1} parent=1 // pred_check_branch
      %666 = sbr.rel (0) target = $region29
    $region28: #{cytoset_forward.1} parent=1 // pred_region
      _
    $region29: #{cytoset_forward.1} parent=1 // pred_fallthru
      _
    // Predicated region
    $region30: #{cytoset_forward.1} parent=1 // pred_check
      _
    $region31: #{cytoset_forward.1} parent=1 // pred_check_branch
      %668 = sbr.rel (0) target = $region33
    $region32: #{cytoset_forward.1} parent=1 // pred_region
      _
    $region33: #{cytoset_forward.1} parent=1 // pred_fallthru
      _
    %669 = vsyncpa [#allocation3], 1
    %670 = vsyncpa [#allocation5], 1

</llo_original>
